<compile_context>
chip_gen: v7x
topology: tpu7x:2x2x1
jax: 0.10.0
libtpu: 0.0.40
codegen_flags: <defaults>
</compile_context>

<pallas_src>
import jax
import jax.numpy as jnp
from jax.experimental import pallas as pl
from jax.experimental.pallas import tpu as pltpu

INF = 10000000000000.0  # matches self.inf in the PyTorch module


# --------------------------------------------------------------------------
# Hardware introspection (trace-time; falls back to conservative defaults).
# --------------------------------------------------------------------------
def _device_info():
    kind = ""
    try:
        dev = jax.devices()[0]
        kind = (getattr(dev, "device_kind", "") or "").lower()
    except Exception:
        pass

    vmem_cap = None
    try:
        vmem_cap = int(pltpu.get_tpu_info().vmem_capacity_bytes)
    except Exception:
        vmem_cap = None

    is_v7 = ("v7" in kind) or ("tpu7" in kind)
    if vmem_cap is None or vmem_cap <= 0:
        if is_v7:
            vmem_cap = 64 * 1024 * 1024
        elif ("v5" in kind) or ("v6" in kind):
            vmem_cap = 128 * 1024 * 1024
        else:
            vmem_cap = 64 * 1024 * 1024          # conservative default

    bf16_eup = ("v6" in kind) or is_v7           # v5e and older: f32 EUP only
    two_tc = is_v7 or ("v4" in kind) or ("v5p" in kind) or ("v5 p" in kind)
    return kind, vmem_cap, bf16_eup, two_tc


def _lane_pad(n):
    return ((n + 127) // 128) * 128


def _sublane_pad(n):
    return ((n + 7) // 8) * 8


# --------------------------------------------------------------------------
# Batch-block selection (intermediate-aware, megacore-friendly).
# --------------------------------------------------------------------------
def _pick_batch_block(batch, bytes_per_batch, vmem_cap, prefer_even_steps):
    """Pick a batch block TB (divisor of `batch`).

    Large enough that each grid step moves a sizeable working set (amortizes
    the ~0.35us/step pipeline overhead), small enough that the double-buffered
    I/O blocks plus the resident (L1, L2) intermediates fit comfortably in the
    generation's physical VMEM.  On 2-TensorCore parts an even number of grid
    steps is preferred so the 'parallel' batch axis splits evenly.
    """
    if batch <= 1:
        return 1
    # Bigger per-step working sets on 128 MiB-VMEM parts (v5e/v6e), smaller on v7x.
    target_bytes = 4 * 1024 * 1024 if vmem_cap > 96 * 1024 * 1024 else 512 * 1024
    fit = max(1, int(0.70 * vmem_cap) // max(1, bytes_per_batch))
    want = max(1, -(-target_bytes // max(1, bytes_per_batch)))   # ceil division
    tb = max(1, min(batch // 2, want, fit))
    while batch % tb:
        tb -= 1
    if prefer_even_steps and (batch // tb) % 2 != 0:
        for t in range(tb, 0, -1):
            if batch % t == 0 and (batch // t) % 2 == 0:
                tb = t
                break
    return tb


# --------------------------------------------------------------------------
# Kernel
# --------------------------------------------------------------------------
def _make_kernel(exp_dtype):
    """Build the kernel; `exp_dtype` selects bf16 exp (v6e/v7x) or f32 (v5e)."""

    def kernel(x1_ref, x2_ref, amask_ref, bmask_ref, o1_ref, o2_ref):
        # Block shapes:
        #   x1_ref: (TB, L1, D) bf16     x2_ref: (TB, L2, D) bf16
        #   amask_ref: (TB, L1, 1) f32   bmask_ref: (TB, 1, L2) f32   (additive)
        #   o1_ref: (TB, L1, D)          o2_ref: (TB, L2, D)
        x1 = x1_ref[...]
        x2 = x2_ref[...]
        a_mask = amask_ref[...]
        b_mask = bmask_ref[...]

        # attn[b, i, j] = sum_d x1[b, i, d] * x2[b, j, d]
        # bf16 operands, f32 accumulation -> MXU-native, no transposes.
        attn = jax.lax.dot_general(
            x1, x2,
            dimension_numbers=(((2,), (2,)), ((0,), (0,))),
            preferred_element_type=jnp.float32)                    # (TB, L1, L2)

        # ---- a-half: softmax(attn + a_mask, axis=2); normalize AFTER the PV
        # matmul so the (L1, L2) tile is never scaled on the VPU. ----
        sa = attn + a_mask
        sa = sa - jnp.max(sa, axis=2, keepdims=True)
        ea = jnp.exp(sa.astype(exp_dtype))                         # EUP
        denom_a = jnp.sum(ea.astype(jnp.float32), axis=2, keepdims=True)
        out1 = jax.lax.dot_general(
            ea.astype(jnp.bfloat16), x2,
            dimension_numbers=(((2,), (1,)), ((0,), (0,))),
            preferred_element_type=jnp.float32)                    # (TB, L1, D)
        inv_a = pl.reciprocal(denom_a, approx=True)                # (TB, L1, 1)
        o1_ref[...] = (out1 * inv_a).astype(o1_ref.dtype)

        # ---- b-half: softmax(attn + b_mask, axis=1); pre-matmul normalization
        # (inv_b is lane-oriented, so the sublane-broadcast multiply is cheap
        # and avoids a lane->sublane relayout). ----
        sb = attn + b_mask
        sb = sb - jnp.max(sb, axis=1, keepdims=True)
        eb = jnp.exp(sb.astype(exp_dtype))
        denom_b = jnp.sum(eb.astype(jnp.float32), axis=1, keepdims=True)
        inv_b = pl.reciprocal(denom_b, approx=True)                # (TB, 1, L2)
        pb = (eb * inv_b.astype(eb.dtype)).astype(jnp.bfloat16)
        # out2[b, j, d] = sum_i attention_b[b, i, j] * x1[b, i, d]
        out2 = jax.lax.dot_general(
            pb, x1,
            dimension_numbers=(((1,), (1,)), ((0,), (0,))),
            preferred_element_type=jnp.float32)                    # (TB, L2, D)
        o2_ref[...] = out2.astype(o2_ref.dtype)

    return kernel


# --------------------------------------------------------------------------
# Wrapper
# --------------------------------------------------------------------------
def bi_attention(in_x1, in_x2, x1_len, x2_len):
    """Pallas TPU implementation of Bi_Attention.forward.

    in_x1: (B, L1, D) float32,  in_x2: (B, L2, D) float32
    x1_len: (B, L1) float32 validity mask (1.0 valid / 0.0 pad)
    x2_len: (B, L2) float32 validity mask
    returns: (out_x1 (B, L1, D), out_x2 (B, L2, D))
    """
    B, L1, D = in_x1.shape
    _, L2, _ = in_x2.shape
    assert in_x2.shape[0] == B and in_x2.shape[2] == D
    assert x1_len.shape == (B, L1) and x2_len.shape == (B, L2)

    _, vmem_cap, bf16_eup, two_tc = _device_info()
    exp_dtype = jnp.bfloat16 if bf16_eup else jnp.float32

    # bf16 MXU operands, cast once here (fuses with upstream producers under
    # jit).  f32 outputs preserve the module interface / numerics downstream.
    x1 = in_x1.astype(jnp.bfloat16)
    x2 = in_x2.astype(jnp.bfloat16)

    # Additive masks precomputed once (keeps compare/select off the kernel's
    # VPU; preserves the -1e13 f32 swamping quirk exactly).
    a_mask = ((x1_len <= 0.5).astype(jnp.float32) * -INF).reshape(B, L1, 1)
    b_mask = ((x2_len <= 0.5).astype(jnp.float32) * -INF).reshape(B, 1, L2)

    # ---- VMEM accounting per batch element (conservative: lane/sublane padded)
    Dl = _lane_pad(D)
    L2l = _lane_pad(L2)
    in_bytes = (L1 + L2) * Dl * 2                        # bf16 input blocks
    out_bytes = (L1 + L2) * Dl * 4                       # f32 output blocks
    mask_bytes = _sublane_pad(L1) * 128 * 4 + 8 * L2l * 4
    io_per_batch = 2 * (in_bytes + out_bytes + mask_bytes)       # double-buffered
    inter_per_batch = 5 * L1 * L2l * 4 + (L1 + L2) * Dl * 4      # attn/exp/out temps
    bytes_per_batch = io_per_batch + inter_per_batch

    TB = _pick_batch_block(B, bytes_per_batch, vmem_cap, two_tc)
    grid = (B // TB,)

    needed = TB * bytes_per_batch
    vmem_limit = int(min(max(int(needed * 1.5), 32 * 1024 * 1024),
                         int(0.87 * vmem_cap)))

    grid_spec = pltpu.PrefetchScalarGridSpec(
        num_scalar_prefetch=0,
        grid=grid,
        in_specs=[
            pl.BlockSpec((TB, L1, D), lambda b: (b, 0, 0)),
            pl.BlockSpec((TB, L2, D), lambda b: (b, 0, 0)),
            pl.BlockSpec((TB, L1, 1), lambda b: (b, 0, 0)),
            pl.BlockSpec((TB, 1, L2), lambda b: (b, 0, 0)),
        ],
        out_specs=[
            pl.BlockSpec((TB, L1, D), lambda b: (b, 0, 0)),
            pl.BlockSpec((TB, L2, D), lambda b: (b, 0, 0)),
        ],
    )

    out1, out2 = pl.pallas_call(
        _make_kernel(exp_dtype),
        out_shape=(
            jax.ShapeDtypeStruct((B, L1, D), in_x1.dtype),
            jax.ShapeDtypeStruct((B, L2, D), in_x2.dtype),
        ),
        grid_spec=grid_spec,
        compiler_params=pltpu.CompilerParams(
            dimension_semantics=("parallel",),
            vmem_limit_bytes=vmem_limit,
        ),
    )(x1, x2, a_mask, b_mask)

    return out1, out2


# --------------------------------------------------------------------------
# References
# --------------------------------------------------------------------------
def _reference(in_x1, in_x2, x1_len, x2_len):
    """Pure-JAX f32 reference mirroring the PyTorch module."""
    B, L1, _ = in_x1.shape
    L2 = in_x2.shape[1]
    attn = jnp.einsum("bld,bmd->blm", in_x1, in_x2)
    a_mask = ((x1_len <= 0.5).astype(jnp.float32) * -INF).reshape(B, L1, 1)
    b_mask = ((x2_len <= 0.5).astype(jnp.float32) * -INF).reshape(B, 1, L2)
    attention_a = jax.nn.softmax(attn + a_mask, axis=2)
    attention_b = jax.nn.softmax(attn + b_mask, axis=1)
    out1 = jnp.einsum("blm,bmd->bld", attention_a, in_x2)
    out2 = jnp.einsum("blm,bld->bmd", attention_b, in_x1)
    return out1, out2


def _reference_bf16(in_x1, in_x2, x1_len, x2_len):
    """Reference mirroring the kernel's bf16-MXU / f32-accumulation numerics."""
    B, L1, _ = in_x1.shape
    L2 = in_x2.shape[1]
    x1 = in_x1.astype(jnp.bfloat16)
    x2 = in_x2.astype(jnp.bfloat16)
    attn = jax.lax.dot_general(x1, x2, (((2,), (2,)), ((0,), (0,))),
                               preferred_element_type=jnp.float32)
    a_mask = ((x1_len <= 0.5).astype(jnp.float32) * -INF).reshape(B, L1, 1)
    b_mask = ((x2_len <= 0.5).astype(jnp.float32) * -INF).reshape(B, 1, L2)
    attention_a = jax.nn.softmax(attn + a_mask, axis=2)
    attention_b = jax.nn.softmax(attn + b_mask, axis=1)
    out1 = jax.lax.dot_general(attention_a.astype(jnp.bfloat16), x2,
                               (((2,), (1,)), ((0,), (0,))),
                               preferred_element_type=jnp.float32)
    out2 = jax.lax.dot_general(attention_b.astype(jnp.bfloat16), x1,
                               (((1,), (1,)), ((0,), (0,))),
                               preferred_element_type=jnp.float32)
    return out1, out2


# --------------------------------------------------------------------------
# Demo / self-test
# --------------------------------------------------------------------------
if __name__ == "__main__":
    B, L1, L2, D = 2, 8, 8, 32

    key = jax.random.PRNGKey(0)
    k1, k2 = jax.random.split(key)
    in_x1 = jax.random.normal(k1, (B, L1, D), dtype=jnp.float32)
    in_x2 = jax.random.normal(k2, (B, L2, D), dtype=jnp.float32)

    # Deterministic validity masks: first batch fully valid, second has padding.
    x1_len = jnp.stack([
        jnp.ones((L1,), jnp.float32),
        jnp.concatenate([jnp.ones((L1 - 3,), jnp.float32),
                         jnp.zeros((3,), jnp.float32)]),
    ])
    x2_len = jnp.stack([
        jnp.ones((L2,), jnp.float32),
        jnp.concatenate([jnp.ones((L2 - 2,), jnp.float32),
                         jnp.zeros((2,), jnp.float32)]),
    ])

    out1, out2 = jax.jit(bi_attention)(in_x1, in_x2, x1_len, x2_len)
    jax.block_until_ready((out1, out2))

    # Check against a reference mirroring the kernel's bf16/f32 mixed numerics
    # (slack covers bf16 exp on v6e/v7x + approx reciprocals).
    mref1, mref2 = _reference_bf16(in_x1, in_x2, x1_len, x2_len)
    assert jnp.allclose(out1, mref1, atol=3e-2, rtol=3e-2)
    assert jnp.allclose(out2, mref2, atol=3e-2, rtol=3e-2)

    # Looser check against the pure-f32 PyTorch-semantics reference.
    ref1, ref2 = _reference(in_x1, in_x2, x1_len, x2_len)
    assert jnp.allclose(out1, ref1, atol=1e-1, rtol=1e-1)
    assert jnp.allclose(out2, ref2, atol=1e-1, rtol=1e-1)

    print("KERNEL_OK")
</pallas_src>

<mosaic_0001>
module attributes {stable_mosaic.version = 11 : i64} {
  func.func @kernel(%arg0: i32, %arg1: memref<1x8x32xbf16, #tpu.memory_space<vmem>>, %arg2: memref<1x8x32xbf16, #tpu.memory_space<vmem>>, %arg3: memref<1x8x1xf32, #tpu.memory_space<vmem>>, %arg4: memref<1x1x8xf32, #tpu.memory_space<vmem>>, %arg5: memref<1x8x32xf32, #tpu.memory_space<vmem>>, %arg6: memref<1x8x32xf32, #tpu.memory_space<vmem>>) attributes {dimension_semantics = [#tpu.dimension_semantics<parallel>], iteration_bounds = array<i64: 2>, scalar_prefetch = 0 : i64, scratch_operands = 0 : i64, tpu.core_type = #tpu.core_type<tc>, window_params = [{transform_indices = @transform_0, window_bounds = array<i64: 1, 8, 32>}, {transform_indices = @transform_1, window_bounds = array<i64: 1, 8, 32>}, {transform_indices = @transform_2, window_bounds = array<i64: 1, 8, 1>}, {transform_indices = @transform_3, window_bounds = array<i64: 1, 1, 8>}, {transform_indices = @transform_4, window_bounds = array<i64: 1, 8, 32>}, {transform_indices = @transform_5, window_bounds = array<i64: 1, 8, 32>}]} {
    %c0 = arith.constant 0 : index
    %c0_0 = arith.constant 0 : index
    %c0_1 = arith.constant 0 : index
    %0 = vector.load %arg1[%c0, %c0_0, %c0_1] : memref<1x8x32xbf16, #tpu.memory_space<vmem>>, vector<1x8x32xbf16>
    %c0_2 = arith.constant 0 : index
    %c0_3 = arith.constant 0 : index
    %c0_4 = arith.constant 0 : index
    %1 = vector.load %arg2[%c0_2, %c0_3, %c0_4] : memref<1x8x32xbf16, #tpu.memory_space<vmem>>, vector<1x8x32xbf16>
    %c0_5 = arith.constant 0 : index
    %c0_6 = arith.constant 0 : index
    %c0_7 = arith.constant 0 : index
    %2 = vector.load %arg3[%c0_5, %c0_6, %c0_7] : memref<1x8x1xf32, #tpu.memory_space<vmem>>, vector<1x8x1xf32>
    %c0_8 = arith.constant 0 : index
    %c0_9 = arith.constant 0 : index
    %c0_10 = arith.constant 0 : index
    %3 = vector.load %arg4[%c0_8, %c0_9, %c0_10] : memref<1x1x8xf32, #tpu.memory_space<vmem>>, vector<1x1x8xf32>
    %cst = arith.constant dense<0.000000e+00> : vector<1x8x8xf32>
    %4 = tpu.matmul %0, %1, %cst {dimension_numbers = #tpu.dot_dimension_numbers<[2], [2], [1], [1], [0, 0, 0, 1, 1, 1], [0], [0]>} : vector<1x8x32xbf16>, vector<1x8x32xbf16>, vector<1x8x8xf32> -> vector<1x8x8xf32>
    %5 = vector.broadcast %2 : vector<1x8x1xf32> to vector<1x8x8xf32>
    %6 = arith.addf %4, %5 : vector<1x8x8xf32>
    %cst_11 = arith.constant dense<0xFF800000> : vector<1x8xf32>
    %7 = vector.multi_reduction <maximumf>, %6, %cst_11 [2] : vector<1x8x8xf32> to vector<1x8xf32>
    %8 = vector.shape_cast %7 : vector<1x8xf32> to vector<1x8x1xf32>
    %9 = vector.broadcast %8 : vector<1x8x1xf32> to vector<1x8x8xf32>
    %10 = arith.subf %6, %9 : vector<1x8x8xf32>
    %11 = math.exp %10 : vector<1x8x8xf32>
    %cst_12 = arith.constant dense<0.000000e+00> : vector<1x8xf32>
    %12 = vector.multi_reduction <add>, %11, %cst_12 [2] : vector<1x8x8xf32> to vector<1x8xf32>
    %13 = vector.shape_cast %12 : vector<1x8xf32> to vector<1x8x1xf32>
    %14 = arith.truncf %11 : vector<1x8x8xf32> to vector<1x8x8xbf16>
    %cst_13 = arith.constant dense<0.000000e+00> : vector<1x8x32xf32>
    %15 = tpu.matmul %14, %1, %cst_13 {dimension_numbers = #tpu.dot_dimension_numbers<[2], [1], [1], [2], [0, 0, 0, 1, 1, 2], [0], [0]>} : vector<1x8x8xbf16>, vector<1x8x32xbf16>, vector<1x8x32xf32> -> vector<1x8x32xf32>
    %16 = tpu.reciprocal %13 {approx = true} : vector<1x8x1xf32> -> vector<1x8x1xf32>
    %17 = vector.broadcast %16 : vector<1x8x1xf32> to vector<1x8x32xf32>
    %18 = arith.mulf %15, %17 : vector<1x8x32xf32>
    %c0_14 = arith.constant 0 : index
    %c0_15 = arith.constant 0 : index
    %c0_16 = arith.constant 0 : index
    %19 = vector.load %arg5[%c0_14, %c0_15, %c0_16] : memref<1x8x32xf32, #tpu.memory_space<vmem>>, vector<1x8x32xf32>
    tpu.vector_store %arg5[%c0_14, %c0_15, %c0_16], %18 {strides = array<i32>} : memref<1x8x32xf32, #tpu.memory_space<vmem>>, vector<1x8x32xf32>,
    %20 = vector.broadcast %3 : vector<1x1x8xf32> to vector<1x8x8xf32>
    %21 = arith.addf %4, %20 : vector<1x8x8xf32>
    %cst_17 = arith.constant dense<0xFF800000> : vector<1x8xf32>
    %22 = vector.multi_reduction <maximumf>, %21, %cst_17 [1] : vector<1x8x8xf32> to vector<1x8xf32>
    %23 = vector.shape_cast %22 : vector<1x8xf32> to vector<1x1x8xf32>
    %24 = vector.broadcast %23 : vector<1x1x8xf32> to vector<1x8x8xf32>
    %25 = arith.subf %21, %24 : vector<1x8x8xf32>
    %26 = math.exp %25 : vector<1x8x8xf32>
    %cst_18 = arith.constant dense<0.000000e+00> : vector<1x8xf32>
    %27 = vector.multi_reduction <add>, %26, %cst_18 [1] : vector<1x8x8xf32> to vector<1x8xf32>
    %28 = vector.shape_cast %27 : vector<1x8xf32> to vector<1x1x8xf32>
    %29 = tpu.reciprocal %28 {approx = true} : vector<1x1x8xf32> -> vector<1x1x8xf32>
    %30 = vector.broadcast %29 : vector<1x1x8xf32> to vector<1x8x8xf32>
    %31 = arith.mulf %26, %30 : vector<1x8x8xf32>
    %32 = arith.truncf %31 : vector<1x8x8xf32> to vector<1x8x8xbf16>
    %cst_19 = arith.constant dense<0.000000e+00> : vector<1x8x32xf32>
    %33 = tpu.matmul %32, %0, %cst_19 {dimension_numbers = #tpu.dot_dimension_numbers<[1], [1], [2], [2], [0, 0, 0, 2, 1, 2], [0], [0]>} : vector<1x8x8xbf16>, vector<1x8x32xbf16>, vector<1x8x32xf32> -> vector<1x8x32xf32>
    %c0_20 = arith.constant 0 : index
    %c0_21 = arith.constant 0 : index
    %c0_22 = arith.constant 0 : index
    %34 = vector.load %arg6[%c0_20, %c0_21, %c0_22] : memref<1x8x32xf32, #tpu.memory_space<vmem>>, vector<1x8x32xf32>
    tpu.vector_store %arg6[%c0_20, %c0_21, %c0_22], %33 {strides = array<i32>} : memref<1x8x32xf32, #tpu.memory_space<vmem>>, vector<1x8x32xf32>,
    return
  }
  func.func @transform_0(%arg0: i32) -> (i32, i32, i32) {
    %c0_i32 = arith.constant 0 : i32
    %c0_i32_0 = arith.constant 0 : i32
    %c0_i32_1 = arith.constant 0 : i32
    return %arg0, %c0_i32, %c0_i32_0 : i32, i32, i32
  }
  func.func @transform_1(%arg0: i32) -> (i32, i32, i32) {
    %c0_i32 = arith.constant 0 : i32
    %c0_i32_0 = arith.constant 0 : i32
    %c0_i32_1 = arith.constant 0 : i32
    return %arg0, %c0_i32, %c0_i32_0 : i32, i32, i32
  }
  func.func @transform_2(%arg0: i32) -> (i32, i32, i32) {
    %c0_i32 = arith.constant 0 : i32
    %c0_i32_0 = arith.constant 0 : i32
    %c0_i32_1 = arith.constant 0 : i32
    return %arg0, %c0_i32, %c0_i32_0 : i32, i32, i32
  }
  func.func @transform_3(%arg0: i32) -> (i32, i32, i32) {
    %c0_i32 = arith.constant 0 : i32
    %c0_i32_0 = arith.constant 0 : i32
    %c0_i32_1 = arith.constant 0 : i32
    return %arg0, %c0_i32, %c0_i32_0 : i32, i32, i32
  }
  func.func @transform_4(%arg0: i32) -> (i32, i32, i32) {
    %c0_i32 = arith.constant 0 : i32
    %c0_i32_0 = arith.constant 0 : i32
    %c0_i32_1 = arith.constant 0 : i32
    return %arg0, %c0_i32, %c0_i32_0 : i32, i32, i32
  }
  func.func @transform_5(%arg0: i32) -> (i32, i32, i32) {
    %c0_i32 = arith.constant 0 : i32
    %c0_i32_0 = arith.constant 0 : i32
    %c0_i32_1 = arith.constant 0 : i32
    return %arg0, %c0_i32, %c0_i32_0 : i32, i32, i32
  }
}

</mosaic_0001>

<llo_original>
// kernel: bi_attention.1
$region0: #{bi_attention.1}
  #allocation0 [shape = 'u32[]', space=smem, size = 0x4, offset = 0x4, fixed_abs, tag = 'smem constant byte address 0x4 - core index']
  #allocation1 [shape = 'u32[144,128]{1,0:T(1,128)}', space=vmem, size = 0x12000, scoped, tag = 'internal scratch']
  %s0 = inlined_call_operand.vmem [shape: bf16[2,8,32], index: 0, kind: input, shape index: {}]
  %s1 = inlined_call_operand.vmem [shape: bf16[2,8,32], index: 1, kind: input, shape index: {}]
  %s2 = inlined_call_operand.vmem [shape: f32[2,8,1], index: 2, kind: input, shape index: {}]
  %s3 = inlined_call_operand.vmem [shape: f32[2,1,8], index: 3, kind: input, shape index: {}]
  %s4 = inlined_call_operand.hbm [shape: f32[2,8,32], index: 4, kind: output, shape index: {0}]
  %s5 = inlined_call_operand.hbm [shape: f32[2,8,32], index: 5, kind: output, shape index: {1}]
  %6 = xla_tuple %s4, %s5
  %s7 = sld [smem:[#allocation0]]
  $region57: #{bi_attention.1} parent=0
    _
  %s9 = ssub.s32 1, %s7
  %s10 = scalar_select 0, %s9, %s7
  $region1: #{bi_attention.1} parent=0
    #allocation2 [shape = 'u8[8192]{0}', space=vmem, size = 0x2000, scoped, tag = 'output window, operand 0']
    #allocation3 [shape = 's32[2]{0}', space=sflag, size = 0x8, scoped, tag = 'scoped memory for bi_attention.1']
    #allocation4 [shape = 'u8[8192]{0}', space=vmem, size = 0x2000, scoped, tag = 'output window, operand 1']
    #allocation5 [shape = 's32[2]{0}', space=sflag, size = 0x8, scoped, tag = 'scoped memory for bi_attention.1']
    %11 = vsyncpa [#allocation3], 0
    %s12 = scalar_lea.sflag [#allocation3], 1
    %13 = vsyncpa %s12, 0
    %14 = vsyncpa [#allocation5], 0
    %s15 = scalar_lea.sflag [#allocation5], 1
    %16 = vsyncpa %s15, 0
    loop: start=0, step=1, limit=4
    $region2: #{bi_attention.1} parent=1 // loop_pre_header
      _
    $region3: #{bi_attention.1} parent=1 // loop_header
      %s18 = sphi 0, %s22
      %p19 = scmp.ge.s32.totalorder %s18, 4
      %s28 = sphi 0, %s30
      %s31 = sphi 0, %s28
      %s32 = sphi 0, %s31
      %s48 = sphi 0, %s32
      %s54 = sphi 0, %s56
      %s57 = sphi 0, %s54
      %s58 = sphi 0, %s57
      %s74 = sphi 0, %s58
      %s80 = sphi 0, %s82
      %s83 = sphi 0, %s80
      %s84 = sphi 0, %s83
      %s100 = sphi 0, %s84
      %s106 = sphi 0, %s108
      %s109 = sphi 0, %s106
      %s110 = sphi 0, %s109
      %s126 = sphi 0, %s110
      %s132 = sphi 0, %s134
      %s135 = sphi 0, %s132
      %s136 = sphi 0, %s135
      %s152 = sphi 0, %s136
      %s158 = sphi 0, %s160
      %s161 = sphi 0, %s158
      %s162 = sphi 0, %s161
      %s178 = sphi 0, %s162
    $region4: #{bi_attention.1} parent=1 // loop_header_branch
      %21 = sbr.rel (%p19) target = $region8
    $region5: #{bi_attention.1} parent=1 // loop_body
      %s23 = ssub.s32 %s18, 1
      %s24 = ssub.s32 %s18, 2
      %s25 = sadd.s32 %s18, 1
      %s26 = ssub.s32 %s18, %s25
      %p27 = scmp.eq.s32.totalorder %s26, 0
      %s29 = sadd.s32 %s28, 1
      %s30 = scalar_select %p27, %s28, %s29
      %p33 = pneg %p27
      %p34 = scmp.eq.s32.totalorder %s18, 1
      %p35 = por %p33, %p34
      %p36 = scmp.ne.s32.totalorder %s28, %s31
      %p37 = scmp.eq.s32.totalorder %s18, 0
      %p38 = por %p36, %p37
      %p39 = scmp.ne.s32.totalorder %s28, %s31
      %p40 = scmp.eq.s32.totalorder %s23, 1
      %p41 = por %p39, %p40
      %p42 = scmp.ne.s32.totalorder %s31, %s32
      %p43 = scmp.eq.s32.totalorder %s23, 0
      %p44 = por %p42, %p43
      %p45 = scmp.ne.s32.totalorder %s31, %s32
      %p46 = scmp.eq.s32.totalorder %s24, 1
      %p47 = por %p45, %p46
      %p49 = scmp.ne.s32.totalorder %s32, %s48
      %p50 = scmp.eq.s32.totalorder %s24, 0
      %p51 = por %p49, %p50
      %s52 = ssub.s32 %s18, %s25
      %p53 = scmp.eq.s32.totalorder %s52, 0
      %s55 = sadd.s32 %s54, 1
      %s56 = scalar_select %p53, %s54, %s55
      %p59 = pneg %p53
      %p60 = scmp.eq.s32.totalorder %s18, 1
      %p61 = por %p59, %p60
      %p62 = scmp.ne.s32.totalorder %s54, %s57
      %p63 = scmp.eq.s32.totalorder %s18, 0
      %p64 = por %p62, %p63
      %p65 = scmp.ne.s32.totalorder %s54, %s57
      %p66 = scmp.eq.s32.totalorder %s23, 1
      %p67 = por %p65, %p66
      %p68 = scmp.ne.s32.totalorder %s57, %s58
      %p69 = scmp.eq.s32.totalorder %s23, 0
      %p70 = por %p68, %p69
      %p71 = scmp.ne.s32.totalorder %s57, %s58
      %p72 = scmp.eq.s32.totalorder %s24, 1
      %p73 = por %p71, %p72
      %p75 = scmp.ne.s32.totalorder %s58, %s74
      %p76 = scmp.eq.s32.totalorder %s24, 0
      %p77 = por %p75, %p76
      %s78 = ssub.s32 %s18, %s25
      %p79 = scmp.eq.s32.totalorder %s78, 0
      %s81 = sadd.s32 %s80, 1
      %s82 = scalar_select %p79, %s80, %s81
      %p85 = pneg %p79
      %p86 = scmp.eq.s32.totalorder %s18, 1
      %p87 = por %p85, %p86
      %p88 = scmp.ne.s32.totalorder %s80, %s83
      %p89 = scmp.eq.s32.totalorder %s18, 0
      %p90 = por %p88, %p89
      %p91 = scmp.ne.s32.totalorder %s80, %s83
      %p92 = scmp.eq.s32.totalorder %s23, 1
      %p93 = por %p91, %p92
      %p94 = scmp.ne.s32.totalorder %s83, %s84
      %p95 = scmp.eq.s32.totalorder %s23, 0
      %p96 = por %p94, %p95
      %p97 = scmp.ne.s32.totalorder %s83, %s84
      %p98 = scmp.eq.s32.totalorder %s24, 1
      %p99 = por %p97, %p98
      %p101 = scmp.ne.s32.totalorder %s84, %s100
      %p102 = scmp.eq.s32.totalorder %s24, 0
      %p103 = por %p101, %p102
      %s104 = ssub.s32 %s18, %s25
      %p105 = scmp.eq.s32.totalorder %s104, 0
      %s107 = sadd.s32 %s106, 1
      %s108 = scalar_select %p105, %s106, %s107
      %p111 = pneg %p105
      %p112 = scmp.eq.s32.totalorder %s18, 1
      %p113 = por %p111, %p112
      %p114 = scmp.ne.s32.totalorder %s106, %s109
      %p115 = scmp.eq.s32.totalorder %s18, 0
      %p116 = por %p114, %p115
      %p117 = scmp.ne.s32.totalorder %s106, %s109
      %p118 = scmp.eq.s32.totalorder %s23, 1
      %p119 = por %p117, %p118
      %p120 = scmp.ne.s32.totalorder %s109, %s110
      %p121 = scmp.eq.s32.totalorder %s23, 0
      %p122 = por %p120, %p121
      %p123 = scmp.ne.s32.totalorder %s109, %s110
      %p124 = scmp.eq.s32.totalorder %s24, 1
      %p125 = por %p123, %p124
      %p127 = scmp.ne.s32.totalorder %s110, %s126
      %p128 = scmp.eq.s32.totalorder %s24, 0
      %p129 = por %p127, %p128
      %s130 = ssub.s32 %s18, %s25
      %p131 = scmp.eq.s32.totalorder %s130, 0
      %s133 = sadd.s32 %s132, 1
      %s134 = scalar_select %p131, %s132, %s133
      %p137 = pneg %p131
      %p138 = scmp.eq.s32.totalorder %s18, 1
      %p139 = por %p137, %p138
      %p140 = scmp.ne.s32.totalorder %s132, %s135
      %p141 = scmp.eq.s32.totalorder %s18, 0
      %p142 = por %p140, %p141
      %p143 = scmp.ne.s32.totalorder %s132, %s135
      %p144 = scmp.eq.s32.totalorder %s23, 1
      %p145 = por %p143, %p144
      %p146 = scmp.ne.s32.totalorder %s135, %s136
      %p147 = scmp.eq.s32.totalorder %s23, 0
      %p148 = por %p146, %p147
      %p149 = scmp.ne.s32.totalorder %s135, %s136
      %p150 = scmp.eq.s32.totalorder %s24, 1
      %p151 = por %p149, %p150
      %p153 = scmp.ne.s32.totalorder %s136, %s152
      %p154 = scmp.eq.s32.totalorder %s24, 0
      %p155 = por %p153, %p154
      %s156 = ssub.s32 %s18, %s25
      %p157 = scmp.eq.s32.totalorder %s156, 0
      %s159 = sadd.s32 %s158, 1
      %s160 = scalar_select %p157, %s158, %s159
      %p163 = pneg %p157
      %p164 = scmp.eq.s32.totalorder %s18, 1
      %p165 = por %p163, %p164
      %p166 = scmp.ne.s32.totalorder %s158, %s161
      %p167 = scmp.eq.s32.totalorder %s18, 0
      %p168 = por %p166, %p167
      %p169 = scmp.ne.s32.totalorder %s158, %s161
      %p170 = scmp.eq.s32.totalorder %s23, 1
      %p171 = por %p169, %p170
      %p172 = scmp.ne.s32.totalorder %s161, %s162
      %p173 = scmp.eq.s32.totalorder %s23, 0
      %p174 = por %p172, %p173
      %p175 = scmp.ne.s32.totalorder %s161, %s162
      %p176 = scmp.eq.s32.totalorder %s24, 1
      %p177 = por %p175, %p176
      %p179 = scmp.ne.s32.totalorder %s162, %s178
      %p180 = scmp.eq.s32.totalorder %s24, 0
      %p181 = por %p179, %p180
      %p182 = scmp.le.s32.totalorder 1, %s18
      %p183 = scmp.lt.s32.totalorder %s18, 3
      %p184 = pnand %p182, %p183
      %p185 = pneg %p184
      // Predicated region
      $region9: #{bi_attention.1} parent=5 // pred_check
        _
      $region10: #{bi_attention.1} parent=5 // pred_check_branch
        %187 = sbr.rel (%p184) target = $region12
      $region11: #{bi_attention.1} parent=5 // pred_region
        %s188 = ssub.s32 %s18, 1
      $region12: #{bi_attention.1} parent=5 // pred_fallthru
        _
      %p189 = scmp.lt.s32.totalorder %s18, 2
      // Predicated region
      $region13: #{bi_attention.1} parent=5 // pred_check
        %p190 = pneg %p189
      $region14: #{bi_attention.1} parent=5 // pred_check_branch
        %192 = sbr.rel (%p190) target = $region16
      $region15: #{bi_attention.1} parent=5 // pred_region
        // Predicated region
        $region17: #{bi_attention.1} parent=15 // pred_check
          %p193 = pneg %p38
        $region18: #{bi_attention.1} parent=15 // pred_check_branch
          %195 = sbr.rel (%p193) target = $region20
        $region19: #{bi_attention.1} parent=15 // pred_region
          %p196 = scmp.lt.s32.totalorder %s18, 1
          %s197 = scalar_select %p196, %s18, 1
          %s198 = smul.addr %s197, 4
          %s199 = scalar_lea.vmem %s0, %s198
        $region20: #{bi_attention.1} parent=15 // pred_fallthru
          _
        // Predicated region
        $region21: #{bi_attention.1} parent=15 // pred_check
          %p200 = pneg %p64
        $region22: #{bi_attention.1} parent=15 // pred_check_branch
          %202 = sbr.rel (%p200) target = $region24
        $region23: #{bi_attention.1} parent=15 // pred_region
          %p203 = scmp.lt.s32.totalorder %s18, 1
          %s204 = scalar_select %p203, %s18, 1
          %s205 = smul.addr %s204, 4
          %s206 = scalar_lea.vmem %s1, %s205
        $region24: #{bi_attention.1} parent=15 // pred_fallthru
          _
        // Predicated region
        $region25: #{bi_attention.1} parent=15 // pred_check
          %p207 = pneg %p90
        $region26: #{bi_attention.1} parent=15 // pred_check_branch
          %209 = sbr.rel (%p207) target = $region28
        $region27: #{bi_attention.1} parent=15 // pred_region
          %p210 = scmp.lt.s32.totalorder %s18, 1
          %s211 = scalar_select %p210, %s18, 1
          %s212 = smul.addr %s211, 8
          %s213 = scalar_lea.vmem %s2, %s212
        $region28: #{bi_attention.1} parent=15 // pred_fallthru
          _
        // Predicated region
        $region29: #{bi_attention.1} parent=15 // pred_check
          %p214 = pneg %p116
        $region30: #{bi_attention.1} parent=15 // pred_check_branch
          %216 = sbr.rel (%p214) target = $region32
        $region31: #{bi_attention.1} parent=15 // pred_region
          %p217 = scmp.lt.s32.totalorder %s18, 1
          %s218 = scalar_select %p217, %s18, 1
          %s219 = scalar_lea.vmem %s3, %s218
        $region32: #{bi_attention.1} parent=15 // pred_fallthru
          _
      $region16: #{bi_attention.1} parent=5 // pred_fallthru
        _
      %p220 = scmp.le.s32.totalorder 1, %s18
      %p221 = scmp.lt.s32.totalorder %s18, 3
      %p222 = pnand %p220, %p221
      %p223 = pneg %p222
      // Predicated region
      $region33: #{bi_attention.1} parent=5 // pred_check
        _
      $region34: #{bi_attention.1} parent=5 // pred_check_branch
        %225 = sbr.rel (%p222) target = $region36
      $region35: #{bi_attention.1} parent=5 // pred_region
        %s226 = ssub.s32 %s18, 1
        %p227 = scmp.lt.s32.totalorder %s23, 1
        %s228 = scalar_select %p227, %s23, 1
        %s229 = smul.addr %s228, 4
        %s230 = scalar_lea.vmem %s0, %s229
        %p231 = pneg %p44
        %p232 = pneg %p41
        %p233 = scmp.lt.s32.totalorder %s23, 1
        %s234 = scalar_select %p233, %s23, 1
        %s235 = smul.addr %s234, 4
        %s236 = scalar_lea.vmem %s1, %s235
        %p237 = pneg %p70
        %p238 = pneg %p67
        %p239 = scmp.lt.s32.totalorder %s23, 1
        %s240 = scalar_select %p239, %s23, 1
        %s241 = smul.addr %s240, 8
        %s242 = scalar_lea.vmem %s2, %s241
        %p243 = pneg %p96
        %p244 = pneg %p93
        %p245 = scmp.lt.s32.totalorder %s23, 1
        %s246 = scalar_select %p245, %s23, 1
        %s247 = scalar_lea.vmem %s3, %s246
        %p248 = pneg %p122
        %p249 = pneg %p119
        %p250 = pneg %p148
        %p251 = pneg %p145
        %s252 = sand.u32 %s135, 1
        %s253 = scalar_lea.sflag [#allocation3], %s252
        %s254 = sand.u32 %s135, 1
        %s255 = smul.addr %s254, 8
        %s256 = scalar_lea.vmem [#allocation2], %s255
        %p257 = pneg %p174
        %p258 = pneg %p171
        %s259 = sand.u32 %s161, 1
        %s260 = scalar_lea.sflag [#allocation5], %s259
        %s261 = sand.u32 %s161, 1
        %s262 = smul.addr %s261, 8
        %s263 = scalar_lea.vmem [#allocation4], %s262
        %p264 = scmp.lt.s32.totalorder %s23, 1
        %s265 = scalar_select %p264, %s23, 1
        %s266 = smul.addr %s265, 4
        %s267 = scalar_lea.vmem %s0, %s266
        %p268 = scmp.lt.s32.totalorder %s23, 1
        %s269 = scalar_select %p268, %s23, 1
        %s270 = smul.addr %s269, 4
        %s271 = scalar_lea.vmem %s1, %s270
        %p272 = scmp.lt.s32.totalorder %s23, 1
        %s273 = scalar_select %p272, %s23, 1
        %s274 = smul.addr %s273, 8
        %s275 = scalar_lea.vmem %s2, %s274
        %p276 = scmp.lt.s32.totalorder %s23, 1
        %s277 = scalar_select %p276, %s23, 1
        %s278 = scalar_lea.vmem %s3, %s277
        %v280 = vld [vmem:[%s267] sm:$0xf]
        %v281 = vld [vmem:[%s271] sm:$0xf]
        %v282 = vld [vmem:[%s275] sm:$0xff]
        %v283 = vld [vmem:[%s278] sm:$0x1]
        %vm284 = vcmask 261120
        %v286 = vsel %vm284, %v280, 0
        %v289 = vsel %vm284, %v281, 0
        %291 = vmatprep.subr.bf16.mxu0 0
        %292 = vmatpush1.bf16.xpose.msra.mxu0 %v289
        %293 = vmatprep.subr.bf16.mxu0 0
        %294 = vmatpush1.bf16.xpose.msra.mxu0 0
        %295 = vmatprep.subr.bf16.mxu0 0
        %296 = vmatpush1.bf16.xpose.msra.mxu0 0
        %297 = vmatprep.subr.bf16.mxu0 0
        %298 = vmatpush1.bf16.xpose.msra.mxu0 0
        %299 = vmatprep.subr.bf16.mxu0 0
        %300 = vmatpush1.bf16.xpose.msra.mxu0 0
        %301 = vmatprep.subr.bf16.mxu0 0
        %302 = vmatpush1.bf16.xpose.msra.mxu0 0
        %303 = vmatprep.subr.bf16.mxu0 0
        %304 = vmatpush1.bf16.xpose.msra.mxu0 0
        %305 = vmatprep.subr.bf16.mxu0 0
        %306 = vmatpush1.bf16.xpose.msra.mxu0 0
        %307 = vmatprep.subr.bf16.mxu0 0
        %308 = vmatpush1.bf16.xpose.msra.mxu0 0
        %309 = vmatprep.subr.bf16.mxu0 0
        %310 = vmatpush1.bf16.xpose.msra.mxu0 0
        %311 = vmatprep.subr.bf16.mxu0 0
        %312 = vmatpush1.bf16.xpose.msra.mxu0 0
        %313 = vmatprep.subr.bf16.mxu0 0
        %314 = vmatpush1.bf16.xpose.msra.mxu0 0
        %315 = vmatprep.subr.bf16.mxu0 0
        %316 = vmatpush1.bf16.xpose.msra.mxu0 0
        %317 = vmatprep.subr.bf16.mxu0 0
        %318 = vmatpush1.bf16.xpose.msra.mxu0 0
        %319 = vmatprep.subr.bf16.mxu0 0
        %320 = vmatpush1.bf16.xpose.msra.mxu0 0
        %321 = vmatprep.subr.bf16.mxu0 0
        %322 = vmatpush1.bf16.xpose.msra.mxu0 0
        %323 = vmatprep.mubr.bf16.mxu0 0
        %324 = vmatmul.mubr.bf16.gmra.mrb[0].mxu0 %v286
        %v325 = vpop.f32.mrb[0].mxu0
        %v326 = vadd.f32 0.0, %v325
        %v327 = vpop.f32.mrb[0].mxu0
        %v328 = vpop.f32.mrb[0].mxu0
        %v329 = vpop.f32.mrb[0].mxu0
        %330 = vdwg.mxu0
        %332 = vset.pattern.permute.xlu0 0
        %333 = vperm.xlu0 %332, %v282
        %v334 = vpop.permute.xlu0 %333
        %v336 = vadd.f32 %v326, %v334
        %vm337 = vcmask 64512
        %v338 = vsel %vm337, %v336, -inf
        %339 = vmax.xlane.f32.xlu0 %v338
        %v340 = vpop.xlane.xlu0 %339
        %v341 = vsub.f32 %v336, %v340
        %v342 = vmul.f32 %v341, 1.442695
        %v343 = vpow.pop %v342
        %v344 = vsel %vm337, %v343, 0.0
        %345 = vadd.xlane.f32.xlu0 %v344
        %v346 = vpop.xlane.xlu0 %345
        %v347 = vpack.c.bf16 %v343, %v343
        %v349 = vsel %vm337, %v347, 0
        %vm351 = vcmask 1043456
        %v352 = vsel %vm351, %v281, 0
        %354 = vmatprep.subr.bf16.mxu0 0
        %355 = vmatpush1.bf16.msra.mxu0 %v352
        %356 = vmatprep.subr.bf16.mxu0 0
        %357 = vmatpush1.bf16.msra.mxu0 0
        %358 = vmatprep.subr.bf16.mxu0 0
        %359 = vmatpush1.bf16.msra.mxu0 0
        %360 = vmatprep.subr.bf16.mxu0 0
        %361 = vmatpush1.bf16.msra.mxu0 0
        %362 = vmatprep.subr.bf16.mxu0 0
        %363 = vmatpush1.bf16.msra.mxu0 0
        %364 = vmatprep.subr.bf16.mxu0 0
        %365 = vmatpush1.bf16.msra.mxu0 0
        %366 = vmatprep.subr.bf16.mxu0 0
        %367 = vmatpush1.bf16.msra.mxu0 0
        %368 = vmatprep.subr.bf16.mxu0 0
        %369 = vmatpush1.bf16.msra.mxu0 0
        %370 = vmatprep.subr.bf16.mxu0 0
        %371 = vmatpush1.bf16.msra.mxu0 0
        %372 = vmatprep.subr.bf16.mxu0 0
        %373 = vmatpush1.bf16.msra.mxu0 0
        %374 = vmatprep.subr.bf16.mxu0 0
        %375 = vmatpush1.bf16.msra.mxu0 0
        %376 = vmatprep.subr.bf16.mxu0 0
        %377 = vmatpush1.bf16.msra.mxu0 0
        %378 = vmatprep.subr.bf16.mxu0 0
        %379 = vmatpush1.bf16.msra.mxu0 0
        %380 = vmatprep.subr.bf16.mxu0 0
        %381 = vmatpush1.bf16.msra.mxu0 0
        %382 = vmatprep.subr.bf16.mxu0 0
        %383 = vmatpush1.bf16.msra.mxu0 0
        %384 = vmatprep.subr.bf16.mxu0 0
        %385 = vmatpush1.bf16.msra.mxu0 0
        %386 = vmatprep.mubr.bf16.mxu0 0
        %387 = vmatmul.mubr.bf16.gmra.mrb[0].mxu0 %v349
        %v388 = vpop.f32.mrb[0].mxu0
        %v389 = vadd.f32 0.0, %v388
        %v390 = vpop.f32.mrb[0].mxu0
        %v391 = vpop.f32.mrb[0].mxu0
        %v392 = vpop.f32.mrb[0].mxu0
        %393 = vdwg.mxu0
        %v394 = vrcp.pop %v346
        %v395 = vmul.f32 %v389, %v394
        %396 = vst.msk [vmem:[%s256] sm:$0xff] %vm284, %v395
        %v398 = vlaneseq
        %v399 = vshrl.u32 %v398, 7
        %v400 = vsub.s32 0, %v399
        %v401 = vrot.slane %v283, %v400
        %v403 = vadd.f32 %v326, %v401
        %v404 = vsel %vm337, %v403, -inf
        %v405 = vrot.slane %v404, 4
        %v406 = vmax.f32 %v404, %v405
        %v407 = vrot.slane %v406, 2
        %v408 = vmax.f32 %v406, %v407
        %v409 = vrot.slane %v408, 1
        %v410 = vmax.f32 %v408, %v409
        %v411 = vsub.f32 %v403, %v410
        %v412 = vmul.f32 %v411, 1.442695
        %v413 = vpow.pop %v412
        %v414 = vsel %vm337, %v413, 0.0
        %v415 = vrot.slane %v414, 4
        %v416 = vadd.f32 %v414, %v415
        %v417 = vrot.slane %v416, 2
        %v418 = vadd.f32 %v416, %v417
        %v419 = vrot.slane %v418, 1
        %v420 = vadd.f32 %v418, %v419
        %v421 = vrcp.pop %v420
        %v422 = vmul.f32 %v413, %v421
        %v423 = vpack.c.bf16 %v422, %v422
        %424 = vxpose.xlu0.c.b16.start [1/8] %v423, 128
        %425 = vxpose.xlu0.c.b16.cont [2/8] 0, 128
        %426 = vxpose.xlu0.c.b16.cont [3/8] 0, 128
        %427 = vxpose.xlu0.c.b16.cont [4/8] 0, 128
        %428 = vxpose.xlu0.c.b16.cont [5/8] 0, 128
        %429 = vxpose.xlu0.c.b16.cont [6/8] 0, 128
        %430 = vxpose.xlu0.c.b16.cont [7/8] 0, 128
        %431 = vxpose.xlu0.c.b16.end [8/8] 0, 128
        %v432 = vpop.trf.xlu0
        %v433 = vpop.trf.xlu0
        %v434 = vpop.trf.xlu0
        %v435 = vpop.trf.xlu0
        %v436 = vpop.trf.xlu0
        %v437 = vpop.trf.xlu0
        %v438 = vpop.trf.xlu0
        %v439 = vpop.trf.xlu0
        %v441 = vsel %vm337, %v432, 0
        %v443 = vsel %vm351, %v280, 0
        %445 = vmatprep.subr.bf16.mxu0 0
        %446 = vmatpush1.bf16.msra.mxu0 %v443
        %447 = vmatprep.subr.bf16.mxu0 0
        %448 = vmatpush1.bf16.msra.mxu0 0
        %449 = vmatprep.subr.bf16.mxu0 0
        %450 = vmatpush1.bf16.msra.mxu0 0
        %451 = vmatprep.subr.bf16.mxu0 0
        %452 = vmatpush1.bf16.msra.mxu0 0
        %453 = vmatprep.subr.bf16.mxu0 0
        %454 = vmatpush1.bf16.msra.mxu0 0
        %455 = vmatprep.subr.bf16.mxu0 0
        %456 = vmatpush1.bf16.msra.mxu0 0
        %457 = vmatprep.subr.bf16.mxu0 0
        %458 = vmatpush1.bf16.msra.mxu0 0
        %459 = vmatprep.subr.bf16.mxu0 0
        %460 = vmatpush1.bf16.msra.mxu0 0
        %461 = vmatprep.subr.bf16.mxu0 0
        %462 = vmatpush1.bf16.msra.mxu0 0
        %463 = vmatprep.subr.bf16.mxu0 0
        %464 = vmatpush1.bf16.msra.mxu0 0
        %465 = vmatprep.subr.bf16.mxu0 0
        %466 = vmatpush1.bf16.msra.mxu0 0
        %467 = vmatprep.subr.bf16.mxu0 0
        %468 = vmatpush1.bf16.msra.mxu0 0
        %469 = vmatprep.subr.bf16.mxu0 0
        %470 = vmatpush1.bf16.msra.mxu0 0
        %471 = vmatprep.subr.bf16.mxu0 0
        %472 = vmatpush1.bf16.msra.mxu0 0
        %473 = vmatprep.subr.bf16.mxu0 0
        %474 = vmatpush1.bf16.msra.mxu0 0
        %475 = vmatprep.subr.bf16.mxu0 0
        %476 = vmatpush1.bf16.msra.mxu0 0
        %477 = vmatprep.mubr.bf16.mxu0 0
        %478 = vmatmul.mubr.bf16.gmra.mrb[0].mxu0 %v441
        %v479 = vpop.f32.mrb[0].mxu0
        %v480 = vadd.f32 0.0, %v479
        %v481 = vpop.f32.mrb[0].mxu0
        %v482 = vpop.f32.mrb[0].mxu0
        %v483 = vpop.f32.mrb[0].mxu0
        %484 = vdwg.mxu0
        %485 = vst.msk [vmem:[%s263] sm:$0xff] %vm284, %v480
        %s486 = sand.u32 %s135, 1
        %s487 = scalar_lea.sflag [#allocation3], %s486
        %s488 = sand.u32 %s135, 1
        %s489 = smul.addr %s488, 8
        %s490 = scalar_lea.vmem [#allocation2], %s489
        %s491 = sand.u32 %s161, 1
        %s492 = scalar_lea.sflag [#allocation5], %s491
        %s493 = sand.u32 %s161, 1
        %s494 = smul.addr %s493, 8
        %s495 = scalar_lea.vmem [#allocation4], %s494
        // Predicated region
        $region37: #{bi_attention.1} parent=35 // pred_check
          %p496 = pneg %p145
        $region38: #{bi_attention.1} parent=35 // pred_check_branch
          %498 = sbr.rel (%p496) target = $region40
        $region39: #{bi_attention.1} parent=35 // pred_region
          %s500 = ssub.s32 128, 128
          %501 = vsyncadd %s487, %s500
          %s502 = smul.addr %s23, 128
          %s503 = scalar_lea.hbm %s4, %s502
          %s505 = sshll.u32 %s490, 4
          %s506 = int_to_ptr.vmem [resolvable:$true] %s505
          %508 = dma.vmem_to_hbm [thread:$0]  %s506, 128, %s503, %s487
        $region40: #{bi_attention.1} parent=35 // pred_fallthru
          _
        // Predicated region
        $region41: #{bi_attention.1} parent=35 // pred_check
          %p509 = pneg %p171
        $region42: #{bi_attention.1} parent=35 // pred_check_branch
          %511 = sbr.rel (%p509) target = $region44
        $region43: #{bi_attention.1} parent=35 // pred_region
          %s513 = ssub.s32 128, 128
          %514 = vsyncadd %s492, %s513
          %s515 = smul.addr %s23, 128
          %s516 = scalar_lea.hbm %s5, %s515
          %s518 = sshll.u32 %s495, 4
          %s519 = int_to_ptr.vmem [resolvable:$true] %s518
          %521 = dma.vmem_to_hbm [thread:$0]  %s519, 128, %s516, %s492
        $region44: #{bi_attention.1} parent=35 // pred_fallthru
          _
      $region36: #{bi_attention.1} parent=5 // pred_fallthru
        _
      %p522 = scmp.le.s32.totalorder 2, %s18
      // Predicated region
      $region45: #{bi_attention.1} parent=5 // pred_check
        %p523 = pneg %p522
      $region46: #{bi_attention.1} parent=5 // pred_check_branch
        %525 = sbr.rel (%p523) target = $region48
      $region47: #{bi_attention.1} parent=5 // pred_region
        %s526 = ssub.s32 %s18, 2
        // Predicated region
        $region49: #{bi_attention.1} parent=47 // pred_check
          %p527 = pneg %p151
        $region50: #{bi_attention.1} parent=47 // pred_check_branch
          %529 = sbr.rel (%p527) target = $region52
        $region51: #{bi_attention.1} parent=47 // pred_region
          %s530 = sand.u32 %s136, 1
          %s531 = scalar_lea.sflag [#allocation3], %s530
          %s532 = sand.u32 %s136, 1
          %s533 = smul.addr %s532, 8
          %s534 = scalar_lea.vmem [#allocation2], %s533
          %535 = dma.done %s531, 128
        $region52: #{bi_attention.1} parent=47 // pred_fallthru
          _
        // Predicated region
        $region53: #{bi_attention.1} parent=47 // pred_check
          %p536 = pneg %p177
        $region54: #{bi_attention.1} parent=47 // pred_check_branch
          %538 = sbr.rel (%p536) target = $region56
        $region55: #{bi_attention.1} parent=47 // pred_region
          %s539 = sand.u32 %s162, 1
          %s540 = scalar_lea.sflag [#allocation5], %s539
          %s541 = sand.u32 %s162, 1
          %s542 = smul.addr %s541, 8
          %s543 = scalar_lea.vmem [#allocation4], %s542
          %544 = dma.done %s540, 128
        $region56: #{bi_attention.1} parent=47 // pred_fallthru
          _
      $region48: #{bi_attention.1} parent=5 // pred_fallthru
        _
    $region6: #{bi_attention.1} parent=1 // loop_footer
      %s22 = sadd.s32 1, %s18
    $region7: #{bi_attention.1} parent=1 // loop_footer_branch
      %17 = sbr.rel target = $region3
    $region8: #{bi_attention.1} parent=1 // loop_exit
      _
    %545 = vsyncpa [#allocation3], 1
    %s546 = scalar_lea.sflag [#allocation3], 1
    %547 = vsyncpa %s546, 1
    %548 = vsyncpa [#allocation5], 1
    %s549 = scalar_lea.sflag [#allocation5], 1
    %550 = vsyncpa %s549, 1

</llo_original>
